<compile_context>
chip_gen: v5e
topology: v5e:2x2
jax: 0.10.0
libtpu: 0.0.40
codegen_flags: <defaults>
</compile_context>

<pallas_src>
import functools

import jax
import jax.numpy as jnp
from jax.experimental import pallas as pl
from jax.experimental.pallas import tpu as pltpu

LANE = 128
MAX_BLOCK_ROWS = 2048   # (2048, 128) f32 tile = 1 MiB; fits default scoped VMEM everywhere
NUM_CHUNKS = 2          # leading "parallel" axis -> both TensorCores on v7x


def _focal_tversky_sums_kernel(x_ref, t_ref, tp_ref, sp_ref, st_ref, *,
                               total, blocks_per_chunk):
    """Accumulates per-lane partial sums of p*t, p, t over large streaming blocks."""
    c = pl.program_id(0)   # chunk ("parallel")
    i = pl.program_id(1)   # block within chunk ("arbitrary" reduction axis)

    @pl.when(i == 0)
    def _init():
        tp_ref[...] = jnp.zeros_like(tp_ref)
        sp_ref[...] = jnp.zeros_like(sp_ref)
        st_ref[...] = jnp.zeros_like(st_ref)

    block_rows, lane = x_ref.shape
    block_elems = block_rows * lane

    x = x_ref[...].astype(jnp.float32)
    t = t_ref[...].astype(jnp.float32)
    p = jax.nn.sigmoid(x)          # torch.sigmoid(inputs)
    pt = p * t

    # Global (unclamped) block id; the input index_map clamps the actual read so a
    # duplicated/OOB block re-reads valid data, while the mask below zeroes it out.
    gb = c * blocks_per_chunk + i
    block_start = gb * block_elems          # NOTE: int32 math, assumes < 2**31 elements
    full_block = block_start + block_elems <= total

    @pl.when(full_block)
    def _accumulate_full():
        # Cheap VPU-only path for fully-valid blocks (no mask work).
        tp_ref[...] += jnp.sum(pt, axis=0, keepdims=True)
        sp_ref[...] += jnp.sum(p, axis=0, keepdims=True)
        st_ref[...] += jnp.sum(t, axis=0, keepdims=True)

    @pl.when(jnp.logical_not(full_block))
    def _accumulate_masked():
        # Ragged tail / partially-OOB block: mask invalid elements (handles lane-tail
        # padding, partial last block, and fully-OOB duplicated blocks -> contribute 0).
        row = jax.lax.broadcasted_iota(jnp.int32, (block_rows, lane), 0)
        col = jax.lax.broadcasted_iota(jnp.int32, (block_rows, lane), 1)
        flat = block_start + row * lane + col
        mask = flat < total
        tp_ref[...] += jnp.sum(jnp.where(mask, pt, 0.0), axis=0, keepdims=True)
        sp_ref[...] += jnp.sum(jnp.where(mask, p, 0.0), axis=0, keepdims=True)
        st_ref[...] += jnp.sum(jnp.where(mask, t, 0.0), axis=0, keepdims=True)


@functools.partial(jax.jit, static_argnames=("smooth", "alpha", "beta", "gamma"))
def focal_tversky_loss(inputs, targets, smooth=1.0, alpha=0.5, beta=0.5, gamma=1.0):
    # view(-1) semantics; keep native dtype (bf16 inputs stay bf16 over HBM, cast in-kernel).
    x_flat = inputs.reshape(-1)
    t_flat = targets.reshape(-1)
    total = x_flat.shape[0]

    # Minimal pad only to a multiple of the 128-lane width (usually a no-op for NCHW
    # segmentation shapes); padded tail is masked inside the kernel.
    if total % LANE != 0:
        pad = LANE - total % LANE
        x_flat = jnp.pad(x_flat, (0, pad))
        t_flat = jnp.pad(t_flat, (0, pad))
    rows = x_flat.shape[0] // LANE
    x2d = x_flat.reshape(rows, LANE)
    t2d = t_flat.reshape(rows, LANE)

    # Large streaming tiles; use the full row extent when it is small.
    block_rows = rows if rows <= MAX_BLOCK_ROWS else MAX_BLOCK_ROWS
    num_blocks = pl.cdiv(rows, block_rows)
    num_chunks = NUM_CHUNKS if num_blocks >= NUM_CHUNKS else 1
    blocks_per_chunk = pl.cdiv(num_blocks, num_chunks)

    def in_map(c, i):
        # Clamp so duplicated trailing blocks re-read the last valid block (masked to 0).
        return (jnp.minimum(c * blocks_per_chunk + i, num_blocks - 1), 0)

    tile_spec = pl.BlockSpec((block_rows, LANE), in_map)
    acc_spec = pl.BlockSpec((None, 1, LANE), lambda c, i: (c, 0, 0))
    acc_shape = jax.ShapeDtypeStruct((num_chunks, 1, LANE), jnp.float32)

    kernel = functools.partial(
        _focal_tversky_sums_kernel,
        total=total,
        blocks_per_chunk=blocks_per_chunk,
    )

    tp_part, sp_part, st_part = pl.pallas_call(
        kernel,
        out_shape=(acc_shape, acc_shape, acc_shape),
        grid_spec=pltpu.PrefetchScalarGridSpec(
            num_scalar_prefetch=0,
            grid=(num_chunks, blocks_per_chunk),
            in_specs=[tile_spec, tile_spec],
            out_specs=(acc_spec, acc_spec, acc_spec),
        ),
        compiler_params=pltpu.CompilerParams(
            dimension_semantics=("parallel", "arbitrary"),
        ),
    )(x2d, t2d)

    # Scalar epilogue (exact module formula).
    tp = jnp.sum(tp_part)            # sum(p * t)
    sp = jnp.sum(sp_part)            # sum(p)
    st = jnp.sum(st_part)            # sum(t)
    fp = sp - tp                     # sum((1 - t) * p)
    fn = st - tp                     # sum(t * (1 - p))

    tversky = (tp + smooth) / (tp + alpha * fp + beta * fn + smooth)
    focal_tversky = (1.0 - tversky) ** gamma
    return focal_tversky


def _reference(inputs, targets, smooth=1.0, alpha=0.5, beta=0.5, gamma=1.0):
    p = jax.nn.sigmoid(inputs.reshape(-1).astype(jnp.float32))
    t = targets.reshape(-1).astype(jnp.float32)
    tp = jnp.sum(p * t)
    fp = jnp.sum((1.0 - t) * p)
    fn = jnp.sum(t * (1.0 - p))
    tversky = (tp + smooth) / (tp + alpha * fp + beta * fn + smooth)
    return (1.0 - tversky) ** gamma


if __name__ == "__main__":
    key = jax.random.PRNGKey(0)
    k1, k2, k3, k4 = jax.random.split(key, 4)

    # Small NCHW segmentation-style logits + binary mask.
    x = jax.random.normal(k1, (2, 4, 16, 16), dtype=jnp.float32)
    y = jax.random.bernoulli(k2, p=0.3, shape=(2, 4, 16, 16)).astype(jnp.float32)

    loss = focal_tversky_loss(x, y)
    loss = jax.block_until_ready(loss)
    ref = _reference(x, y)
    assert jnp.allclose(loss, ref, atol=1e-5, rtol=1e-5), (loss, ref)

    # Ragged size (not a multiple of 128) to exercise the in-kernel tail masking.
    x2 = jax.random.normal(k3, (2, 3, 7, 5), dtype=jnp.float32)
    y2 = jax.random.bernoulli(k4, p=0.4, shape=(2, 3, 7, 5)).astype(jnp.float32)
    loss2 = jax.block_until_ready(focal_tversky_loss(x2, y2))
    ref2 = _reference(x2, y2)
    assert jnp.allclose(loss2, ref2, atol=1e-5, rtol=1e-5), (loss2, ref2)

    print("KERNEL_OK")
</pallas_src>

<mosaic_0001>
module attributes {stable_mosaic.version = 11 : i64} {
  func.func @_focal_tversky_sums_kernel(%arg0: i32, %arg1: i32, %arg2: memref<16x128xf32, #tpu.memory_space<vmem>>, %arg3: memref<16x128xf32, #tpu.memory_space<vmem>>, %arg4: memref<1x1x128xf32, #tpu.memory_space<vmem>>, %arg5: memref<1x1x128xf32, #tpu.memory_space<vmem>>, %arg6: memref<1x1x128xf32, #tpu.memory_space<vmem>>) attributes {dimension_semantics = [#tpu.dimension_semantics<parallel>, #tpu.dimension_semantics<arbitrary>], iteration_bounds = array<i64: 1, 1>, scalar_prefetch = 0 : i64, scratch_operands = 0 : i64, tpu.core_type = #tpu.core_type<tc>, window_params = [{transform_indices = @transform_0, window_bounds = array<i64: 16, 128>}, {transform_indices = @transform_1, window_bounds = array<i64: 16, 128>}, {transform_indices = @transform_2, window_bounds = array<i64: 1, 1, 128>}, {transform_indices = @transform_3, window_bounds = array<i64: 1, 1, 128>}, {transform_indices = @transform_4, window_bounds = array<i64: 1, 1, 128>}]} {
    %c0_i32 = arith.constant 0 : i32
    %0 = arith.cmpi eq, %arg1, %c0_i32 : i32
    %1 = arith.extui %0 : i1 to i32
    %c0_i32_0 = arith.constant 0 : i32
    %2 = arith.cmpi ne, %1, %c0_i32_0 : i32
    scf.if %2 {
      %cst_8 = arith.constant 0.000000e+00 : f32
      %21 = vector.broadcast %cst_8 : f32 to vector<1x128xf32>
      %c0_9 = arith.constant 0 : index
      %c0_10 = arith.constant 0 : index
      %c0_11 = arith.constant 0 : index
      %22 = vector.load %arg4[%c0_9, %c0_10, %c0_11] : memref<1x1x128xf32, #tpu.memory_space<vmem>>, vector<1x1x128xf32>
      %23 = vector.shape_cast %22 : vector<1x1x128xf32> to vector<1x128xf32>
      %24 = vector.shape_cast %21 : vector<1x128xf32> to vector<1x1x128xf32>
      tpu.vector_store %arg4[%c0_9, %c0_10, %c0_11], %24 {strides = array<i32>} : memref<1x1x128xf32, #tpu.memory_space<vmem>>, vector<1x1x128xf32>,
      %cst_12 = arith.constant 0.000000e+00 : f32
      %25 = vector.broadcast %cst_12 : f32 to vector<1x128xf32>
      %c0_13 = arith.constant 0 : index
      %c0_14 = arith.constant 0 : index
      %c0_15 = arith.constant 0 : index
      %26 = vector.load %arg5[%c0_13, %c0_14, %c0_15] : memref<1x1x128xf32, #tpu.memory_space<vmem>>, vector<1x1x128xf32>
      %27 = vector.shape_cast %26 : vector<1x1x128xf32> to vector<1x128xf32>
      %28 = vector.shape_cast %25 : vector<1x128xf32> to vector<1x1x128xf32>
      tpu.vector_store %arg5[%c0_13, %c0_14, %c0_15], %28 {strides = array<i32>} : memref<1x1x128xf32, #tpu.memory_space<vmem>>, vector<1x1x128xf32>,
      %cst_16 = arith.constant 0.000000e+00 : f32
      %29 = vector.broadcast %cst_16 : f32 to vector<1x128xf32>
      %c0_17 = arith.constant 0 : index
      %c0_18 = arith.constant 0 : index
      %c0_19 = arith.constant 0 : index
      %30 = vector.load %arg6[%c0_17, %c0_18, %c0_19] : memref<1x1x128xf32, #tpu.memory_space<vmem>>, vector<1x1x128xf32>
      %31 = vector.shape_cast %30 : vector<1x1x128xf32> to vector<1x128xf32>
      %32 = vector.shape_cast %29 : vector<1x128xf32> to vector<1x1x128xf32>
      tpu.vector_store %arg6[%c0_17, %c0_18, %c0_19], %32 {strides = array<i32>} : memref<1x1x128xf32, #tpu.memory_space<vmem>>, vector<1x1x128xf32>,
    } else {
    }
    %c0 = arith.constant 0 : index
    %c0_1 = arith.constant 0 : index
    %3 = vector.load %arg2[%c0, %c0_1] : memref<16x128xf32, #tpu.memory_space<vmem>>, vector<16x128xf32>
    %c0_2 = arith.constant 0 : index
    %c0_3 = arith.constant 0 : index
    %4 = vector.load %arg3[%c0_2, %c0_3] : memref<16x128xf32, #tpu.memory_space<vmem>>, vector<16x128xf32>
    %5 = arith.negf %3 : vector<16x128xf32>
    %6 = math.exp %5 : vector<16x128xf32>
    %cst = arith.constant 1.000000e+00 : f32
    %7 = vector.broadcast %cst : f32 to vector<16x128xf32>
    %8 = arith.addf %7, %6 : vector<16x128xf32>
    %9 = arith.divf %7, %8 : vector<16x128xf32>
    %10 = arith.mulf %9, %4 : vector<16x128xf32>
    %c1_i32 = arith.constant 1 : i32
    %11 = arith.muli %arg0, %c1_i32 : i32
    %12 = arith.addi %11, %arg1 : i32
    %c2048_i32 = arith.constant 2048 : i32
    %13 = arith.muli %12, %c2048_i32 : i32
    %c2048_i32_4 = arith.constant 2048 : i32
    %14 = arith.addi %13, %c2048_i32_4 : i32
    %c2048_i32_5 = arith.constant 2048 : i32
    %15 = arith.cmpi sle, %14, %c2048_i32_5 : i32
    %16 = arith.extui %15 : i1 to i32
    %c0_i32_6 = arith.constant 0 : i32
    %17 = arith.cmpi ne, %16, %c0_i32_6 : i32
    scf.if %17 {
      %c0_8 = arith.constant 0 : index
      %c0_9 = arith.constant 0 : index
      %c0_10 = arith.constant 0 : index
      %21 = vector.load %arg4[%c0_8, %c0_9, %c0_10] : memref<1x1x128xf32, #tpu.memory_space<vmem>>, vector<1x1x128xf32>
      %22 = vector.shape_cast %21 : vector<1x1x128xf32> to vector<1x128xf32>
      %cst_11 = arith.constant dense<0.000000e+00> : vector<128xf32>
      %23 = vector.multi_reduction <add>, %10, %cst_11 [0] : vector<16x128xf32> to vector<128xf32>
      %24 = vector.shape_cast %23 : vector<128xf32> to vector<1x128xf32>
      %25 = arith.addf %22, %24 : vector<1x128xf32>
      %c0_12 = arith.constant 0 : index
      %c0_13 = arith.constant 0 : index
      %c0_14 = arith.constant 0 : index
      %26 = vector.load %arg4[%c0_12, %c0_13, %c0_14] : memref<1x1x128xf32, #tpu.memory_space<vmem>>, vector<1x1x128xf32>
      %27 = vector.shape_cast %26 : vector<1x1x128xf32> to vector<1x128xf32>
      %28 = vector.shape_cast %25 : vector<1x128xf32> to vector<1x1x128xf32>
      tpu.vector_store %arg4[%c0_12, %c0_13, %c0_14], %28 {strides = array<i32>} : memref<1x1x128xf32, #tpu.memory_space<vmem>>, vector<1x1x128xf32>,
      %c0_15 = arith.constant 0 : index
      %c0_16 = arith.constant 0 : index
      %c0_17 = arith.constant 0 : index
      %29 = vector.load %arg5[%c0_15, %c0_16, %c0_17] : memref<1x1x128xf32, #tpu.memory_space<vmem>>, vector<1x1x128xf32>
      %30 = vector.shape_cast %29 : vector<1x1x128xf32> to vector<1x128xf32>
      %cst_18 = arith.constant dense<0.000000e+00> : vector<128xf32>
      %31 = vector.multi_reduction <add>, %9, %cst_18 [0] : vector<16x128xf32> to vector<128xf32>
      %32 = vector.shape_cast %31 : vector<128xf32> to vector<1x128xf32>
      %33 = arith.addf %30, %32 : vector<1x128xf32>
      %c0_19 = arith.constant 0 : index
      %c0_20 = arith.constant 0 : index
      %c0_21 = arith.constant 0 : index
      %34 = vector.load %arg5[%c0_19, %c0_20, %c0_21] : memref<1x1x128xf32, #tpu.memory_space<vmem>>, vector<1x1x128xf32>
      %35 = vector.shape_cast %34 : vector<1x1x128xf32> to vector<1x128xf32>
      %36 = vector.shape_cast %33 : vector<1x128xf32> to vector<1x1x128xf32>
      tpu.vector_store %arg5[%c0_19, %c0_20, %c0_21], %36 {strides = array<i32>} : memref<1x1x128xf32, #tpu.memory_space<vmem>>, vector<1x1x128xf32>,
      %c0_22 = arith.constant 0 : index
      %c0_23 = arith.constant 0 : index
      %c0_24 = arith.constant 0 : index
      %37 = vector.load %arg6[%c0_22, %c0_23, %c0_24] : memref<1x1x128xf32, #tpu.memory_space<vmem>>, vector<1x1x128xf32>
      %38 = vector.shape_cast %37 : vector<1x1x128xf32> to vector<1x128xf32>
      %cst_25 = arith.constant dense<0.000000e+00> : vector<128xf32>
      %39 = vector.multi_reduction <add>, %4, %cst_25 [0] : vector<16x128xf32> to vector<128xf32>
      %40 = vector.shape_cast %39 : vector<128xf32> to vector<1x128xf32>
      %41 = arith.addf %38, %40 : vector<1x128xf32>
      %c0_26 = arith.constant 0 : index
      %c0_27 = arith.constant 0 : index
      %c0_28 = arith.constant 0 : index
      %42 = vector.load %arg6[%c0_26, %c0_27, %c0_28] : memref<1x1x128xf32, #tpu.memory_space<vmem>>, vector<1x1x128xf32>
      %43 = vector.shape_cast %42 : vector<1x1x128xf32> to vector<1x128xf32>
      %44 = vector.shape_cast %41 : vector<1x128xf32> to vector<1x1x128xf32>
      tpu.vector_store %arg6[%c0_26, %c0_27, %c0_28], %44 {strides = array<i32>} : memref<1x1x128xf32, #tpu.memory_space<vmem>>, vector<1x1x128xf32>,
    } else {
    }
    %true = arith.constant true
    %18 = arith.xori %15, %true : i1
    %19 = arith.extui %18 : i1 to i32
    %c0_i32_7 = arith.constant 0 : i32
    %20 = arith.cmpi ne, %19, %c0_i32_7 : i32
    scf.if %20 {
      %21 = tpu.iota {dimensions = array<i32: 0>} : vector<16x128xi32>
      %22 = tpu.iota {dimensions = array<i32: 1>} : vector<16x128xi32>
      %c128_i32 = arith.constant 128 : i32
      %23 = vector.broadcast %c128_i32 : i32 to vector<16x128xi32>
      %24 = arith.muli %21, %23 : vector<16x128xi32>
      %25 = vector.broadcast %13 : i32 to vector<16x128xi32>
      %26 = arith.addi %25, %24 : vector<16x128xi32>
      %27 = arith.addi %26, %22 : vector<16x128xi32>
      %c2048_i32_8 = arith.constant 2048 : i32
      %28 = vector.broadcast %c2048_i32_8 : i32 to vector<16x128xi32>
      %29 = arith.cmpi slt, %27, %28 : vector<16x128xi32>
      %c0_9 = arith.constant 0 : index
      %c0_10 = arith.constant 0 : index
      %c0_11 = arith.constant 0 : index
      %30 = vector.load %arg4[%c0_9, %c0_10, %c0_11] : memref<1x1x128xf32, #tpu.memory_space<vmem>>, vector<1x1x128xf32>
      %31 = vector.shape_cast %30 : vector<1x1x128xf32> to vector<1x128xf32>
      %cst_12 = arith.constant 0.000000e+00 : f32
      %32 = vector.broadcast %cst_12 : f32 to vector<16x128xf32>
      %33 = arith.select %29, %10, %32 : vector<16x128xi1>, vector<16x128xf32>
      %cst_13 = arith.constant dense<0.000000e+00> : vector<128xf32>
      %34 = vector.multi_reduction <add>, %33, %cst_13 [0] : vector<16x128xf32> to vector<128xf32>
      %35 = vector.shape_cast %34 : vector<128xf32> to vector<1x128xf32>
      %36 = arith.addf %31, %35 : vector<1x128xf32>
      %c0_14 = arith.constant 0 : index
      %c0_15 = arith.constant 0 : index
      %c0_16 = arith.constant 0 : index
      %37 = vector.load %arg4[%c0_14, %c0_15, %c0_16] : memref<1x1x128xf32, #tpu.memory_space<vmem>>, vector<1x1x128xf32>
      %38 = vector.shape_cast %37 : vector<1x1x128xf32> to vector<1x128xf32>
      %39 = vector.shape_cast %36 : vector<1x128xf32> to vector<1x1x128xf32>
      tpu.vector_store %arg4[%c0_14, %c0_15, %c0_16], %39 {strides = array<i32>} : memref<1x1x128xf32, #tpu.memory_space<vmem>>, vector<1x1x128xf32>,
      %c0_17 = arith.constant 0 : index
      %c0_18 = arith.constant 0 : index
      %c0_19 = arith.constant 0 : index
      %40 = vector.load %arg5[%c0_17, %c0_18, %c0_19] : memref<1x1x128xf32, #tpu.memory_space<vmem>>, vector<1x1x128xf32>
      %41 = vector.shape_cast %40 : vector<1x1x128xf32> to vector<1x128xf32>
      %cst_20 = arith.constant 0.000000e+00 : f32
      %42 = vector.broadcast %cst_20 : f32 to vector<16x128xf32>
      %43 = arith.select %29, %9, %42 : vector<16x128xi1>, vector<16x128xf32>
      %cst_21 = arith.constant dense<0.000000e+00> : vector<128xf32>
      %44 = vector.multi_reduction <add>, %43, %cst_21 [0] : vector<16x128xf32> to vector<128xf32>
      %45 = vector.shape_cast %44 : vector<128xf32> to vector<1x128xf32>
      %46 = arith.addf %41, %45 : vector<1x128xf32>
      %c0_22 = arith.constant 0 : index
      %c0_23 = arith.constant 0 : index
      %c0_24 = arith.constant 0 : index
      %47 = vector.load %arg5[%c0_22, %c0_23, %c0_24] : memref<1x1x128xf32, #tpu.memory_space<vmem>>, vector<1x1x128xf32>
      %48 = vector.shape_cast %47 : vector<1x1x128xf32> to vector<1x128xf32>
      %49 = vector.shape_cast %46 : vector<1x128xf32> to vector<1x1x128xf32>
      tpu.vector_store %arg5[%c0_22, %c0_23, %c0_24], %49 {strides = array<i32>} : memref<1x1x128xf32, #tpu.memory_space<vmem>>, vector<1x1x128xf32>,
      %c0_25 = arith.constant 0 : index
      %c0_26 = arith.constant 0 : index
      %c0_27 = arith.constant 0 : index
      %50 = vector.load %arg6[%c0_25, %c0_26, %c0_27] : memref<1x1x128xf32, #tpu.memory_space<vmem>>, vector<1x1x128xf32>
      %51 = vector.shape_cast %50 : vector<1x1x128xf32> to vector<1x128xf32>
      %cst_28 = arith.constant 0.000000e+00 : f32
      %52 = vector.broadcast %cst_28 : f32 to vector<16x128xf32>
      %53 = arith.select %29, %4, %52 : vector<16x128xi1>, vector<16x128xf32>
      %cst_29 = arith.constant dense<0.000000e+00> : vector<128xf32>
      %54 = vector.multi_reduction <add>, %53, %cst_29 [0] : vector<16x128xf32> to vector<128xf32>
      %55 = vector.shape_cast %54 : vector<128xf32> to vector<1x128xf32>
      %56 = arith.addf %51, %55 : vector<1x128xf32>
      %c0_30 = arith.constant 0 : index
      %c0_31 = arith.constant 0 : index
      %c0_32 = arith.constant 0 : index
      %57 = vector.load %arg6[%c0_30, %c0_31, %c0_32] : memref<1x1x128xf32, #tpu.memory_space<vmem>>, vector<1x1x128xf32>
      %58 = vector.shape_cast %57 : vector<1x1x128xf32> to vector<1x128xf32>
      %59 = vector.shape_cast %56 : vector<1x128xf32> to vector<1x1x128xf32>
      tpu.vector_store %arg6[%c0_30, %c0_31, %c0_32], %59 {strides = array<i32>} : memref<1x1x128xf32, #tpu.memory_space<vmem>>, vector<1x1x128xf32>,
    } else {
    }
    return
  }
  func.func @transform_0(%arg0: i32, %arg1: i32) -> (i32, i32) {
    %c1_i32 = arith.constant 1 : i32
    %0 = arith.muli %arg0, %c1_i32 : i32
    %1 = arith.addi %0, %arg1 : i32
    %c0_i32 = arith.constant 0 : i32
    %2 = arith.minsi %1, %c0_i32 : i32
    %c0_i32_0 = arith.constant 0 : i32
    %c0_i32_1 = arith.constant 0 : i32
    return %2, %c0_i32_0 : i32, i32
  }
  func.func @transform_1(%arg0: i32, %arg1: i32) -> (i32, i32) {
    %c1_i32 = arith.constant 1 : i32
    %0 = arith.muli %arg0, %c1_i32 : i32
    %1 = arith.addi %0, %arg1 : i32
    %c0_i32 = arith.constant 0 : i32
    %2 = arith.minsi %1, %c0_i32 : i32
    %c0_i32_0 = arith.constant 0 : i32
    %c0_i32_1 = arith.constant 0 : i32
    return %2, %c0_i32_0 : i32, i32
  }
  func.func @transform_2(%arg0: i32, %arg1: i32) -> (i32, i32, i32) {
    %c0_i32 = arith.constant 0 : i32
    %c0_i32_0 = arith.constant 0 : i32
    %c0_i32_1 = arith.constant 0 : i32
    return %arg0, %c0_i32, %c0_i32_0 : i32, i32, i32
  }
  func.func @transform_3(%arg0: i32, %arg1: i32) -> (i32, i32, i32) {
    %c0_i32 = arith.constant 0 : i32
    %c0_i32_0 = arith.constant 0 : i32
    %c0_i32_1 = arith.constant 0 : i32
    return %arg0, %c0_i32, %c0_i32_0 : i32, i32, i32
  }
  func.func @transform_4(%arg0: i32, %arg1: i32) -> (i32, i32, i32) {
    %c0_i32 = arith.constant 0 : i32
    %c0_i32_0 = arith.constant 0 : i32
    %c0_i32_1 = arith.constant 0 : i32
    return %arg0, %c0_i32, %c0_i32_0 : i32, i32, i32
  }
}

</mosaic_0001>

<llo_original>
// kernel: focal_tversky_loss.1
$region0: #{focal_tversky_loss.1}
  #allocation0 [shape = 'u32[]', space=smem, size = 0x4, offset = 0x4, fixed_abs, tag = 'smem constant byte address 0x4 - core index']
  #allocation1 [shape = 'u32[72,128]{1,0:T(1,128)}', space=vmem, size = 0x9000, scoped, tag = 'internal scratch']
  %s0 = inlined_call_operand.vmem [shape: f32[16,128], index: 0, kind: input, shape index: {}]
  %s1 = inlined_call_operand.vmem [shape: f32[16,128], index: 1, kind: input, shape index: {}]
  %s2 = inlined_call_operand.vmem [shape: f32[1,1,128], index: 2, kind: output, shape index: {0}]
  %s3 = inlined_call_operand.vmem [shape: f32[1,1,128], index: 3, kind: output, shape index: {1}]
  %s4 = inlined_call_operand.vmem [shape: f32[1,1,128], index: 4, kind: output, shape index: {2}]
  %5 = xla_tuple %s2, %s3, %s4
  %s6 = sld [smem:[#allocation0]]
  $region46: #{focal_tversky_loss.1} parent=0
    _
  %s8 = ssub.s32 1, %s6
  %s9 = scalar_select 0, %s8, %s6
  // Predicated region
  $region2: #{focal_tversky_loss.1} parent=0 // pred_check
    _
  $region3: #{focal_tversky_loss.1} parent=0 // pred_check_branch
    %11 = sbr.rel (0) target = $region5
  $region4: #{focal_tversky_loss.1} parent=0 // pred_region
    %s12 = sadd.s32 0, 0
    %p13 = scmp.lt.s32.totalorder %s12, 0
    %s14 = scalar_select %p13, %s12, 0
    %s15 = smul.u32 2, %s14
    %p16 = scmp.lt.s32.totalorder %s15, 1
    %s17 = scalar_select %p16, %s15, 1
    %s18 = smul.addr %s17, 8
    %s19 = scalar_lea.vmem %s0, %s18
    %s20 = sadd.s32 0, 0
    %p21 = scmp.lt.s32.totalorder %s20, 0
    %s22 = scalar_select %p21, %s20, 0
    %s23 = smul.u32 2, %s22
  $region5: #{focal_tversky_loss.1} parent=0 // pred_fallthru
    _
  // Predicated region
  $region6: #{focal_tversky_loss.1} parent=0 // pred_check
    _
  $region7: #{focal_tversky_loss.1} parent=0 // pred_check_branch
    %25 = sbr.rel (0) target = $region9
  $region8: #{focal_tversky_loss.1} parent=0 // pred_region
    %s26 = sadd.s32 0, 0
    %p27 = scmp.lt.s32.totalorder %s26, 0
    %s28 = scalar_select %p27, %s26, 0
    %s29 = smul.u32 2, %s28
    %p30 = scmp.lt.s32.totalorder %s29, 1
    %s31 = scalar_select %p30, %s29, 1
    %s32 = smul.addr %s31, 8
    %s33 = scalar_lea.vmem %s1, %s32
    %s34 = sadd.s32 0, 0
    %p35 = scmp.lt.s32.totalorder %s34, 0
    %s36 = scalar_select %p35, %s34, 0
    %s37 = smul.u32 2, %s36
  $region9: #{focal_tversky_loss.1} parent=0 // pred_fallthru
    _
  %s38 = sadd.s32 0, 0
  %p39 = scmp.lt.s32.totalorder %s38, 0
  %s40 = scalar_select %p39, %s38, 0
  %s41 = smul.u32 2, %s40
  %p42 = scmp.lt.s32.totalorder %s41, 1
  %s43 = scalar_select %p42, %s41, 1
  %s44 = smul.addr %s43, 8
  %s45 = scalar_lea.vmem %s0, %s44
  %s46 = sadd.s32 0, 0
  %p47 = scmp.lt.s32.totalorder %s46, 0
  %s48 = scalar_select %p47, %s46, 0
  %s49 = smul.u32 2, %s48
  %p50 = scmp.lt.s32.totalorder %s49, 1
  %s51 = scalar_select %p50, %s49, 1
  %s52 = smul.addr %s51, 8
  %s53 = scalar_lea.vmem %s1, %s52
  %s54 = sadd.s32 0, 0
  %p55 = scmp.lt.s32.totalorder %s54, 0
  %s56 = scalar_select %p55, %s54, 0
  %s57 = smul.u32 2, %s56
  %p58 = scmp.lt.s32.totalorder %s57, 1
  %s59 = scalar_select %p58, %s57, 1
  %s60 = smul.addr %s59, 8
  %s61 = scalar_lea.vmem %s0, %s60
  %s62 = sadd.s32 0, 0
  %p63 = scmp.lt.s32.totalorder %s62, 0
  %s64 = scalar_select %p63, %s62, 0
  %s65 = smul.u32 2, %s64
  %s66 = sadd.s32 0, 0
  %p67 = scmp.lt.s32.totalorder %s66, 0
  %s68 = scalar_select %p67, %s66, 0
  %s69 = smul.u32 2, %s68
  %p70 = scmp.lt.s32.totalorder %s69, 1
  %s71 = scalar_select %p70, %s69, 1
  %s72 = smul.addr %s71, 8
  %s73 = scalar_lea.vmem %s1, %s72
  %s74 = sadd.s32 0, 0
  %p75 = scmp.lt.s32.totalorder %s74, 0
  %s76 = scalar_select %p75, %s74, 0
  %s77 = smul.u32 2, %s76
  %p78 = scmp.eq.s32.totalorder 0, 0
  // Predicated region
  $region10: #{focal_tversky_loss.1} parent=0 // pred_check
    %p79 = pneg %p78
  $region11: #{focal_tversky_loss.1} parent=0 // pred_check_branch
    %81 = sbr.rel (%p79) target = $region13
  $region12: #{focal_tversky_loss.1} parent=0 // pred_region
    %82 = vst [vmem:[%s2] sm:$0x1] 0.0
    %83 = vst [vmem:[%s3] sm:$0x1] 0.0
    %84 = vst [vmem:[%s4] sm:$0x1] 0.0
  $region13: #{focal_tversky_loss.1} parent=0 // pred_fallthru
    _
  %v85 = vld [vmem:[%s61] sm:$0xff]
  %v86 = vld [vmem:[%s61 + $0x8] sm:$0xff]
  %v87 = vld [vmem:[%s73] sm:$0xff]
  %v88 = vld [vmem:[%s73 + $0x8] sm:$0xff]
  %v89 = vxor.u32 %v85, 2147483648
  %v90 = vxor.u32 %v86, 2147483648
  %v91 = vmul.f32 %v89, 1.442695
  %v92 = vpow.pop %v91
  %v93 = vmul.f32 %v90, 1.442695
  %v94 = vpow.pop %v93
  %v95 = vadd.f32 %v92, 1.0
  %v96 = vadd.f32 %v94, 1.0
  %v97 = vrcp.pop %v95
  %v98 = vmul.f32 %v95, %v97
  %v99 = vsub.f32 1.0, %v98
  %v100 = vmul.f32 %v97, %v99
  %v101 = vadd.f32 %v97, %v100
  %vm102 = vweird.f32 %v95
  %vm103 = vweird.f32 %v97
  %vm104 = vmor %vm102, %vm103
  %v105 = vsel %vm104, %v97, %v101
  %v106 = vand.u32 2147483647, %v95
  %vm107 = vcmp.eq.f32.partialorder %v106, 8.507059e+37
  %v108 = vand.u32 %v95, 2147483648
  %v109 = vor.u32 1.1754944e-38, %v108
  %v110 = vsel %vm107, %v109, %v105
  %v111 = vmul.f32 1.0, %v110
  %v112 = vrcp.pop %v96
  %v113 = vmul.f32 %v96, %v112
  %v114 = vsub.f32 1.0, %v113
  %v115 = vmul.f32 %v112, %v114
  %v116 = vadd.f32 %v112, %v115
  %vm117 = vweird.f32 %v96
  %vm118 = vweird.f32 %v112
  %vm119 = vmor %vm117, %vm118
  %v120 = vsel %vm119, %v112, %v116
  %v121 = vand.u32 2147483647, %v96
  %vm122 = vcmp.eq.f32.partialorder %v121, 8.507059e+37
  %v123 = vand.u32 %v96, 2147483648
  %v124 = vor.u32 1.1754944e-38, %v123
  %v125 = vsel %vm122, %v124, %v120
  %v126 = vmul.f32 1.0, %v125
  %v127 = vmul.f32 %v111, %v87
  %v128 = vmul.f32 %v126, %v88
  %s129 = sadd.s32 0, 0
  %s130 = smul.u32 %s129, 2048
  %s131 = sadd.s32 %s130, 2048
  %p132 = scmp.le.s32.totalorder %s131, 2048
  // Predicated region
  $region14: #{focal_tversky_loss.1} parent=0 // pred_check
    %p133 = pneg %p132
  $region15: #{focal_tversky_loss.1} parent=0 // pred_check_branch
    %135 = sbr.rel (%p133) target = $region17
  $region16: #{focal_tversky_loss.1} parent=0 // pred_region
    %v136 = vld [vmem:[%s2] sm:$0x1]
    %v137 = vadd.f32 %v127, %v128
    %v138 = vrot.slane %v137, 4
    %v139 = vadd.f32 %v137, %v138
    %v140 = vrot.slane %v139, 2
    %v141 = vadd.f32 %v139, %v140
    %v142 = vrot.slane %v141, 1
    %v143 = vadd.f32 %v141, %v142
    %v144 = vadd.f32 %v136, %v143
    %145 = vst [vmem:[%s2] sm:$0x1] %v144
    %v146 = vld [vmem:[%s3] sm:$0x1]
    %v147 = vadd.f32 %v111, %v126
    %v148 = vrot.slane %v147, 4
    %v149 = vadd.f32 %v147, %v148
    %v150 = vrot.slane %v149, 2
    %v151 = vadd.f32 %v149, %v150
    %v152 = vrot.slane %v151, 1
    %v153 = vadd.f32 %v151, %v152
    %v154 = vadd.f32 %v146, %v153
    %155 = vst [vmem:[%s3] sm:$0x1] %v154
    %v156 = vld [vmem:[%s4] sm:$0x1]
    %v157 = vadd.f32 %v87, %v88
    %v158 = vrot.slane %v157, 4
    %v159 = vadd.f32 %v157, %v158
    %v160 = vrot.slane %v159, 2
    %v161 = vadd.f32 %v159, %v160
    %v162 = vrot.slane %v161, 1
    %v163 = vadd.f32 %v161, %v162
    %v164 = vadd.f32 %v156, %v163
    %165 = vst [vmem:[%s4] sm:$0x1] %v164
  $region17: #{focal_tversky_loss.1} parent=0 // pred_fallthru
    _
  %p166 = scmp.gt.s32.totalorder %s131, 2048
  // Predicated region
  $region18: #{focal_tversky_loss.1} parent=0 // pred_check
    %p167 = pneg %p166
  $region19: #{focal_tversky_loss.1} parent=0 // pred_check_branch
    %169 = sbr.rel (%p167) target = $region21
  $region20: #{focal_tversky_loss.1} parent=0 // pred_region
    %v170 = vlaneseq
    %v171 = vshrl.u32 %v170, 7
    %v172 = vadd.s32 %v171, 8
    %v173 = vlaneseq
    %v174 = vand.u32 %v173, 127
    %v175 = vmul.u32 %v171, 128
    %v176 = vmul.u32 %v172, 128
    %v177 = vstv %s130
    %v178 = vadd.s32 %v177, %v175
    %v179 = vadd.s32 %v177, %v176
    %v180 = vadd.s32 %v178, %v174
    %v181 = vadd.s32 %v179, %v174
    %vm182 = vcmp.lt.s32.totalorder %v180, 2048
    %vm183 = vcmp.lt.s32.totalorder %v181, 2048
    %v184 = vld [vmem:[%s2] sm:$0x1]
    %v185 = vsel %vm182, %v127, 0.0
    %v186 = vsel %vm183, %v128, 0.0
    %v187 = vadd.f32 %v185, %v186
    %v188 = vrot.slane %v187, 4
    %v189 = vadd.f32 %v187, %v188
    %v190 = vrot.slane %v189, 2
    %v191 = vadd.f32 %v189, %v190
    %v192 = vrot.slane %v191, 1
    %v193 = vadd.f32 %v191, %v192
    %v194 = vadd.f32 %v184, %v193
    %195 = vst [vmem:[%s2] sm:$0x1] %v194
    %v196 = vld [vmem:[%s3] sm:$0x1]
    %v197 = vsel %vm182, %v111, 0.0
    %v198 = vsel %vm183, %v126, 0.0
    %v199 = vadd.f32 %v197, %v198
    %v200 = vrot.slane %v199, 4
    %v201 = vadd.f32 %v199, %v200
    %v202 = vrot.slane %v201, 2
    %v203 = vadd.f32 %v201, %v202
    %v204 = vrot.slane %v203, 1
    %v205 = vadd.f32 %v203, %v204
    %v206 = vadd.f32 %v196, %v205
    %207 = vst [vmem:[%s3] sm:$0x1] %v206
    %v208 = vld [vmem:[%s4] sm:$0x1]
    %v209 = vsel %vm182, %v87, 0.0
    %v210 = vsel %vm183, %v88, 0.0
    %v211 = vadd.f32 %v209, %v210
    %v212 = vrot.slane %v211, 4
    %v213 = vadd.f32 %v211, %v212
    %v214 = vrot.slane %v213, 2
    %v215 = vadd.f32 %v213, %v214
    %v216 = vrot.slane %v215, 1
    %v217 = vadd.f32 %v215, %v216
    %v218 = vadd.f32 %v208, %v217
    %219 = vst [vmem:[%s4] sm:$0x1] %v218
  $region21: #{focal_tversky_loss.1} parent=0 // pred_fallthru
    _
  // Predicated region
  $region22: #{focal_tversky_loss.1} parent=0 // pred_check
    _
  $region23: #{focal_tversky_loss.1} parent=0 // pred_check_branch
    %221 = sbr.rel (0) target = $region25
  $region24: #{focal_tversky_loss.1} parent=0 // pred_region
    _
  $region25: #{focal_tversky_loss.1} parent=0 // pred_fallthru
    _
  // Predicated region
  $region26: #{focal_tversky_loss.1} parent=0 // pred_check
    _
  $region27: #{focal_tversky_loss.1} parent=0 // pred_check_branch
    %223 = sbr.rel (0) target = $region29
  $region28: #{focal_tversky_loss.1} parent=0 // pred_region
    _
  $region29: #{focal_tversky_loss.1} parent=0 // pred_fallthru
    _
  // Predicated region
  $region30: #{focal_tversky_loss.1} parent=0 // pred_check
    _
  $region31: #{focal_tversky_loss.1} parent=0 // pred_check_branch
    %225 = sbr.rel (0) target = $region33
  $region32: #{focal_tversky_loss.1} parent=0 // pred_region
    _
  $region33: #{focal_tversky_loss.1} parent=0 // pred_fallthru
    _
  // Predicated region
  $region34: #{focal_tversky_loss.1} parent=0 // pred_check
    _
  $region35: #{focal_tversky_loss.1} parent=0 // pred_check_branch
    %227 = sbr.rel (0) target = $region37
  $region36: #{focal_tversky_loss.1} parent=0 // pred_region
    _
  $region37: #{focal_tversky_loss.1} parent=0 // pred_fallthru
    _
  // Predicated region
  $region38: #{focal_tversky_loss.1} parent=0 // pred_check
    _
  $region39: #{focal_tversky_loss.1} parent=0 // pred_check_branch
    %229 = sbr.rel (0) target = $region41
  $region40: #{focal_tversky_loss.1} parent=0 // pred_region
    _
  $region41: #{focal_tversky_loss.1} parent=0 // pred_fallthru
    _
  // Predicated region
  $region42: #{focal_tversky_loss.1} parent=0 // pred_check
    _
  $region43: #{focal_tversky_loss.1} parent=0 // pred_check_branch
    %231 = sbr.rel (0) target = $region45
  $region44: #{focal_tversky_loss.1} parent=0 // pred_region
    _
  $region45: #{focal_tversky_loss.1} parent=0 // pred_fallthru
    _

</llo_original>
